<compile_context>
chip_gen: v7x
topology: tpu7x:2x2x1
jax: 0.10.0
libtpu: 0.0.40
codegen_flags: <defaults>
</compile_context>

<pallas_src>
import numpy as np
import jax
import jax.numpy as jnp
from jax.experimental import pallas as pl
from jax.experimental.pallas import tpu as pltpu


def _round_up(x, m):
    return ((x + m - 1) // m) * m


def _choose_tiles(M, K, N):
    # Lane-dense (x128) K/N tiles, sublane-aligned (x8) M tile.
    # 256-wide N/M tiles feed the v6e/v7x 256x256 MXU; 128-multiples also map
    # cleanly onto v5e's 4x 128x128 MXU.  tk capped at 512 keeps the
    # double-buffered footprint small enough for every generation.
    tm = min(_round_up(M, 8), 256)
    tn = min(_round_up(N, 128), 256)
    tk = min(_round_up(K, 128), 512)
    return tm, tn, tk


# ----------------------------------------------------------------------------
# Kernel:  out[i, j] = sum_k x[i, k] @ wT[k, j]   (+ bias on last K step)
# ----------------------------------------------------------------------------
def _bio_linear_kernel(x_ref, wt_ref, b_ref, o_ref, acc_ref):
    k = pl.program_id(2)

    @pl.when(k == 0)
    def _init():
        acc_ref[...] = jnp.zeros_like(acc_ref)

    acc_ref[...] += jnp.dot(x_ref[...], wt_ref[...],
                            preferred_element_type=jnp.float32)

    @pl.when(k == pl.num_programs(2) - 1)
    def _finalize():
        o_ref[...] = (acc_ref[...] + b_ref[...]).astype(o_ref.dtype)


# ----------------------------------------------------------------------------
# One-time weight preparation (do this at init, NOT per forward call):
# transpose to [in_dim, out_dim] and pad K/N to tile-aligned, lane-dense sizes.
# Optionally cast the weight once to bf16 (compute_dtype=jnp.bfloat16) to halve
# HBM traffic and feed the MXU at full rate.
# ----------------------------------------------------------------------------
def prepare_bio_linear2d_weights(weight, bias, compute_dtype=jnp.float32):
    out_dim, in_dim = weight.shape
    _, tn, tk = _choose_tiles(8, in_dim, out_dim)
    K_pad = _round_up(in_dim, tk)
    N_pad = _round_up(out_dim, tn)
    wt = jnp.transpose(weight).astype(compute_dtype)          # (K, N), once
    wt = jnp.pad(wt, ((0, K_pad - in_dim), (0, N_pad - out_dim)))
    b2 = jnp.pad(bias.reshape(1, out_dim).astype(jnp.float32),
                 ((0, 0), (0, N_pad - out_dim)))
    return {"wt_padded": wt, "bias_padded": b2,
            "in_dim": in_dim, "out_dim": out_dim}


# ----------------------------------------------------------------------------
# Forward:  x [B, in_dim]  ->  [B, out_dim]
# ----------------------------------------------------------------------------
def bio_linear2d_forward(x, prepared):
    wt = prepared["wt_padded"]        # (K_pad, N_pad)
    b2 = prepared["bias_padded"]      # (1,  N_pad)
    in_dim = prepared["in_dim"]
    out_dim = prepared["out_dim"]

    M, K = x.shape
    assert K == in_dim, "input feature dim mismatch"
    K_pad, N_pad = wt.shape

    out_dtype = x.dtype
    if x.dtype != wt.dtype:
        x = x.astype(wt.dtype)        # match compute dtype chosen at prepare

    tm, tn, tk = _choose_tiles(M, K, out_dim)
    M_pad = _round_up(M, tm)

    if (M_pad != M) or (K_pad != K):
        x = jnp.pad(x, ((0, M_pad - M), (0, K_pad - K)))

    grid = (M_pad // tm, N_pad // tn, K_pad // tk)

    in_bytes = jnp.dtype(wt.dtype).itemsize
    out_bytes = jnp.dtype(out_dtype).itemsize
    cost = pl.CostEstimate(
        flops=2 * M_pad * K_pad * N_pad,
        transcendentals=0,
        bytes_accessed=(M_pad * K_pad + K_pad * N_pad + N_pad) * in_bytes
                       + M_pad * N_pad * out_bytes,
    )

    # Double-buffered tile footprint (+ f32 accumulator), with headroom.
    footprint = (2 * (tm * tk + tk * tn + tn) * in_bytes
                 + 2 * tm * tn * out_bytes + tm * tn * 4)
    vmem_limit = int(min(max(2 * footprint, 32 << 20), 48 << 20))

    out_padded = pl.pallas_call(
        _bio_linear_kernel,
        out_shape=jax.ShapeDtypeStruct((M_pad, N_pad), out_dtype),
        grid_spec=pltpu.PrefetchScalarGridSpec(
            num_scalar_prefetch=0,
            grid=grid,
            in_specs=[
                pl.BlockSpec((tm, tk), lambda i, j, k: (i, k)),   # x tile
                pl.BlockSpec((tk, tn), lambda i, j, k: (k, j)),   # W^T tile
                pl.BlockSpec((1, tn), lambda i, j, k: (0, j)),    # bias tile
            ],
            out_specs=pl.BlockSpec((tm, tn), lambda i, j, k: (i, j)),
            scratch_shapes=[pltpu.VMEM((tm, tn), jnp.float32)],
        ),
        compiler_params=pltpu.CompilerParams(
            dimension_semantics=("parallel", "parallel", "arbitrary"),
            vmem_limit_bytes=vmem_limit,
        ),
        cost_estimate=cost,
    )(x, wt, b2)

    return out_padded[:M, :out_dim]


# ----------------------------------------------------------------------------
# Module-equivalent parameter / buffer construction (deterministic)
# ----------------------------------------------------------------------------
def make_bio_linear2d_params(key, in_dim, out_dim, in_fold=1, out_fold=1,
                             out_ring=False):
    assert in_dim % in_fold == 0
    assert out_dim % out_fold == 0
    in_dim_fold = in_dim // in_fold
    out_dim_fold = out_dim // out_fold
    in_dim_sqrt = int(np.sqrt(in_dim_fold))
    out_dim_sqrt = int(np.sqrt(out_dim_fold))

    # in_coordinates (init-time buffer; unused in forward)
    xg = np.linspace(1 / (2 * in_dim_sqrt), 1 - 1 / (2 * in_dim_sqrt),
                     num=in_dim_sqrt)
    X, Y = np.meshgrid(xg, xg)
    in_coords = np.transpose(np.array([X.reshape(-1), Y.reshape(-1)])).astype(
        np.float32)

    # out_coordinates (init-time buffer; unused in forward)
    if out_ring:
        thetas = np.linspace(1 / (2 * out_dim_fold) * 2 * np.pi,
                             (1 - 1 / (2 * out_dim_fold)) * 2 * np.pi,
                             num=out_dim_fold)
        out_coords = (0.5 + np.transpose(
            np.array([np.cos(thetas), np.sin(thetas)])) / 4).astype(np.float32)
    else:
        xg = np.linspace(1 / (2 * out_dim_sqrt), 1 - 1 / (2 * out_dim_sqrt),
                         num=out_dim_sqrt)
        X, Y = np.meshgrid(xg, xg)
        out_coords = np.transpose(
            np.array([X.reshape(-1), Y.reshape(-1)])).astype(np.float32)

    # nn.Linear default init: U(-1/sqrt(in_dim), 1/sqrt(in_dim)) for W and b
    kw, kb = jax.random.split(key)
    bound = 1.0 / np.sqrt(in_dim)
    weight = jax.random.uniform(kw, (out_dim, in_dim), jnp.float32,
                                minval=-bound, maxval=bound)
    bias = jax.random.uniform(kb, (out_dim,), jnp.float32,
                              minval=-bound, maxval=bound)
    return {
        "weight": weight,
        "bias": bias,
        "in_coordinates": jnp.asarray(in_coords),
        "out_coordinates": jnp.asarray(out_coords),
    }


if __name__ == "__main__":
    # Small shapes consistent with the module: in_dim/out_dim must be perfect
    # squares (per fold) for the coordinate-grid construction.
    batch = 8
    in_dim = 256   # 16 x 16 spatial grid of input neurons
    out_dim = 64   # 8 x 8 spatial grid of output neurons

    key = jax.random.PRNGKey(0)
    kx, kp = jax.random.split(key)
    params = make_bio_linear2d_params(kp, in_dim, out_dim)

    # One-time prep: transpose + pad (and optionally cast) the weight/bias.
    prepared = prepare_bio_linear2d_weights(params["weight"], params["bias"],
                                            compute_dtype=jnp.float32)

    x = jax.random.normal(kx, (batch, in_dim), jnp.float32)

    out = bio_linear2d_forward(x, prepared)
    out = jax.block_until_ready(out)

    # Reference check (plain JAX) for sanity.
    ref = x @ params["weight"].T + params["bias"]
    assert out.shape == (batch, out_dim)
    np.testing.assert_allclose(np.asarray(out), np.asarray(ref),
                               rtol=1e-5, atol=1e-5)

    print("KERNEL_OK")
</pallas_src>

<mosaic_0001>
module attributes {stable_mosaic.version = 11 : i64} {
  func.func @_bio_linear_kernel(%arg0: i32, %arg1: i32, %arg2: i32, %arg3: memref<8x256xf32, #tpu.memory_space<vmem>>, %arg4: memref<256x128xf32, #tpu.memory_space<vmem>>, %arg5: memref<1x128xf32, #tpu.memory_space<vmem>>, %arg6: memref<8x128xf32, #tpu.memory_space<vmem>>, %arg7: memref<8x128xf32, #tpu.memory_space<vmem>>) attributes {dimension_semantics = [#tpu.dimension_semantics<parallel>, #tpu.dimension_semantics<parallel>, #tpu.dimension_semantics<arbitrary>], iteration_bounds = array<i64: 1, 1, 1>, scalar_prefetch = 0 : i64, scratch_operands = 1 : i64, tpu.core_type = #tpu.core_type<tc>, window_params = [{transform_indices = @transform_0, window_bounds = array<i64: 8, 256>}, {transform_indices = @transform_1, window_bounds = array<i64: 256, 128>}, {transform_indices = @transform_2, window_bounds = array<i64: 1, 128>}, {transform_indices = @transform_3, window_bounds = array<i64: 8, 128>}]} {
    %c0_i32 = arith.constant 0 : i32
    %0 = arith.cmpi eq, %arg2, %c0_i32 : i32
    %1 = arith.extui %0 : i1 to i32
    %c0_i32_0 = arith.constant 0 : i32
    %2 = arith.cmpi ne, %1, %c0_i32_0 : i32
    scf.if %2 {
      %cst_10 = arith.constant 0.000000e+00 : f32
      %12 = vector.broadcast %cst_10 : f32 to vector<8x128xf32>
      %c0_11 = arith.constant 0 : index
      %c0_12 = arith.constant 0 : index
      %13 = vector.load %arg7[%c0_11, %c0_12] : memref<8x128xf32, #tpu.memory_space<vmem>>, vector<8x128xf32>
      tpu.vector_store %arg7[%c0_11, %c0_12], %12 {strides = array<i32>} : memref<8x128xf32, #tpu.memory_space<vmem>>, vector<8x128xf32>,
    } else {
    }
    %c0 = arith.constant 0 : index
    %c0_1 = arith.constant 0 : index
    %3 = vector.load %arg7[%c0, %c0_1] : memref<8x128xf32, #tpu.memory_space<vmem>>, vector<8x128xf32>
    %c0_2 = arith.constant 0 : index
    %c0_3 = arith.constant 0 : index
    %4 = vector.load %arg3[%c0_2, %c0_3] : memref<8x256xf32, #tpu.memory_space<vmem>>, vector<8x256xf32>
    %c0_4 = arith.constant 0 : index
    %c0_5 = arith.constant 0 : index
    %5 = vector.load %arg4[%c0_4, %c0_5] : memref<256x128xf32, #tpu.memory_space<vmem>>, vector<256x128xf32>
    %cst = arith.constant dense<0.000000e+00> : vector<8x128xf32>
    %6 = tpu.matmul %4, %5, %cst {dimension_numbers = #tpu.dot_dimension_numbers<[1], [0], [0], [1], [0, 0, 1, 1], [], []>} : vector<8x256xf32>, vector<256x128xf32>, vector<8x128xf32> -> vector<8x128xf32>
    %7 = arith.addf %3, %6 : vector<8x128xf32>
    %c0_6 = arith.constant 0 : index
    %c0_7 = arith.constant 0 : index
    %8 = vector.load %arg7[%c0_6, %c0_7] : memref<8x128xf32, #tpu.memory_space<vmem>>, vector<8x128xf32>
    tpu.vector_store %arg7[%c0_6, %c0_7], %7 {strides = array<i32>} : memref<8x128xf32, #tpu.memory_space<vmem>>, vector<8x128xf32>,
    %c0_i32_8 = arith.constant 0 : i32
    %9 = arith.cmpi eq, %arg2, %c0_i32_8 : i32
    %10 = arith.extui %9 : i1 to i32
    %c0_i32_9 = arith.constant 0 : i32
    %11 = arith.cmpi ne, %10, %c0_i32_9 : i32
    scf.if %11 {
      %c0_10 = arith.constant 0 : index
      %c0_11 = arith.constant 0 : index
      %12 = vector.load %arg7[%c0_10, %c0_11] : memref<8x128xf32, #tpu.memory_space<vmem>>, vector<8x128xf32>
      %c0_12 = arith.constant 0 : index
      %c0_13 = arith.constant 0 : index
      %13 = vector.load %arg5[%c0_12, %c0_13] : memref<1x128xf32, #tpu.memory_space<vmem>>, vector<1x128xf32>
      %14 = vector.broadcast %13 : vector<1x128xf32> to vector<8x128xf32>
      %15 = arith.addf %12, %14 : vector<8x128xf32>
      %c0_14 = arith.constant 0 : index
      %c0_15 = arith.constant 0 : index
      %16 = vector.load %arg6[%c0_14, %c0_15] : memref<8x128xf32, #tpu.memory_space<vmem>>, vector<8x128xf32>
      tpu.vector_store %arg6[%c0_14, %c0_15], %15 {strides = array<i32>} : memref<8x128xf32, #tpu.memory_space<vmem>>, vector<8x128xf32>,
    } else {
    }
    return
  }
  func.func @transform_0(%arg0: i32, %arg1: i32, %arg2: i32) -> (i32, i32) {
    %c0_i32 = arith.constant 0 : i32
    return %arg0, %arg2 : i32, i32
  }
  func.func @transform_1(%arg0: i32, %arg1: i32, %arg2: i32) -> (i32, i32) {
    %c0_i32 = arith.constant 0 : i32
    return %arg2, %arg1 : i32, i32
  }
  func.func @transform_2(%arg0: i32, %arg1: i32, %arg2: i32) -> (i32, i32) {
    %c0_i32 = arith.constant 0 : i32
    %c0_i32_0 = arith.constant 0 : i32
    return %c0_i32, %arg1 : i32, i32
  }
  func.func @transform_3(%arg0: i32, %arg1: i32, %arg2: i32) -> (i32, i32) {
    %c0_i32 = arith.constant 0 : i32
    return %arg0, %arg1 : i32, i32
  }
}

</mosaic_0001>

<llo_original>
// kernel: tpu_custom_call.1
$region0: #{tpu_custom_call.1}
  #allocation0 [shape = 'u32[]', space=smem, size = 0x4, offset = 0x4, fixed_abs, tag = 'smem constant byte address 0x4 - core index']
  #allocation1 [shape = 'u32[144,128]{1,0:T(1,128)}', space=vmem, size = 0x12000, scoped, tag = 'internal scratch']
  #allocation2 [shape = 'f32[8,128]{1,0:T(8,128)}', space=vmem, size = 0x1000, scoped, tag = 'scratch operand']
  %s0 = inlined_call_operand.hbm [shape: f32[8,256], index: 0, kind: input, shape index: {}]
  %s1 = inlined_call_operand.hbm [shape: f32[256,128], index: 1, kind: input, shape index: {}]
  %s2 = inlined_call_operand.vmem [shape: f32[1,128], index: 2, kind: input, shape index: {}]
  %s3 = inlined_call_operand.hbm [shape: f32[8,128], index: 3, kind: output, shape index: {}]
  %s4 = sld [smem:[#allocation0]]
  $region38: #{tpu_custom_call.1} parent=0
    _
  %s6 = ssub.s32 1, %s4
  %s7 = scalar_select 0, %s6, %s4
  $region1: #{tpu_custom_call.1} parent=0
    #allocation3 [shape = 'u8[8192]{0}', space=vmem, size = 0x2000, scoped, tag = 'input window, operand 0, single buffered']
    #allocation4 [shape = 's32[1]{0}', space=sflag, size = 0x4, scoped, tag = 'scoped memory for tpu_custom_call.1']
    #allocation5 [shape = 's32[1]{0}', space=sflag, size = 0x4, scoped, tag = 'scoped memory for tpu_custom_call.1']
    #allocation6 [shape = 'u8[131072]{0}', space=vmem, size = 0x20000, scoped, tag = 'input window, operand 1, single buffered']
    #allocation7 [shape = 's32[1]{0}', space=sflag, size = 0x4, scoped, tag = 'scoped memory for tpu_custom_call.1']
    #allocation8 [shape = 'u8[4096]{0}', space=vmem, size = 0x1000, scoped, tag = 'output window, operand 0, single buffered']
    %8 = vsyncpa [#allocation4], 0
    %9 = vsyncpa [#allocation7], 0
    %10 = vsyncpa [#allocation5], 0
    // Predicated region
    $region2: #{tpu_custom_call.1} parent=1 // pred_check
      _
    $region3: #{tpu_custom_call.1} parent=1 // pred_check_branch
      %12 = sbr.rel (0) target = $region5
    $region4: #{tpu_custom_call.1} parent=1 // pred_region
      %s14 = ssub.s32 256, 256
      %15 = vsyncadd [#allocation4], %s14
      %s17 = sshll.u32 [#allocation3], 4
      %s18 = int_to_ptr.vmem [resolvable:$true] %s17
      %20 = dma.hbm_to_vmem [thread:$0]  %s0, 256, %s18, [#allocation4]
    $region5: #{tpu_custom_call.1} parent=1 // pred_fallthru
      _
    // Predicated region
    $region6: #{tpu_custom_call.1} parent=1 // pred_check
      _
    $region7: #{tpu_custom_call.1} parent=1 // pred_check_branch
      %22 = sbr.rel (0) target = $region9
    $region8: #{tpu_custom_call.1} parent=1 // pred_region
      %s24 = ssub.s32 4096, 4096
      %25 = vsyncadd [#allocation7], %s24
      %s26 = sshll.u32 [#allocation6], 4
      %s27 = int_to_ptr.vmem [resolvable:$true] %s26
      %32 = dma.hbm_to_vmem [thread:$0]  %s1, 4096, %s27, [#allocation7], 128, 128, 8
    $region9: #{tpu_custom_call.1} parent=1 // pred_fallthru
      _
    // Predicated region
    $region10: #{tpu_custom_call.1} parent=1 // pred_check
      _
    $region11: #{tpu_custom_call.1} parent=1 // pred_check_branch
      %34 = sbr.rel (0) target = $region13
    $region12: #{tpu_custom_call.1} parent=1 // pred_region
      _
    $region13: #{tpu_custom_call.1} parent=1 // pred_fallthru
      _
    // Predicated region
    $region14: #{tpu_custom_call.1} parent=1 // pred_check
      _
    $region15: #{tpu_custom_call.1} parent=1 // pred_check_branch
      %36 = sbr.rel (0) target = $region17
    $region16: #{tpu_custom_call.1} parent=1 // pred_region
      %37 = dma.done [#allocation4], 256
    $region17: #{tpu_custom_call.1} parent=1 // pred_fallthru
      _
    // Predicated region
    $region18: #{tpu_custom_call.1} parent=1 // pred_check
      _
    $region19: #{tpu_custom_call.1} parent=1 // pred_check_branch
      %39 = sbr.rel (0) target = $region21
    $region20: #{tpu_custom_call.1} parent=1 // pred_region
      %40 = dma.done [#allocation7], 4096
    $region21: #{tpu_custom_call.1} parent=1 // pred_fallthru
      _
    %p41 = scmp.eq.s32.totalorder 0, 0
    // Predicated region
    $region22: #{tpu_custom_call.1} parent=1 // pred_check
      %p42 = pneg %p41
    $region23: #{tpu_custom_call.1} parent=1 // pred_check_branch
      %44 = sbr.rel (%p42) target = $region25
    $region24: #{tpu_custom_call.1} parent=1 // pred_region
      %45 = vst [vmem:[#allocation2] sm:$0xff] 0.0
    $region25: #{tpu_custom_call.1} parent=1 // pred_fallthru
      _
    %v46 = vld [vmem:[#allocation2] sm:$0xff]
    %v47 = vld [vmem:[#allocation3] sm:$0xff]
    %v48 = vld [vmem:[#allocation3 + $0x8] sm:$0xff]
    %v49 = vld [vmem:[#allocation6] sm:$0xff]
    %v50 = vld [vmem:[#allocation6 + $0x8] sm:$0xff]
    %v51 = vld [vmem:[#allocation6 + $0x10] sm:$0xff]
    %v52 = vld [vmem:[#allocation6 + $0x18] sm:$0xff]
    %v53 = vld [vmem:[#allocation6 + $0x20] sm:$0xff]
    %v54 = vld [vmem:[#allocation6 + $0x28] sm:$0xff]
    %v55 = vld [vmem:[#allocation6 + $0x30] sm:$0xff]
    %v56 = vld [vmem:[#allocation6 + $0x38] sm:$0xff]
    %v57 = vld [vmem:[#allocation6 + $0x40] sm:$0xff]
    %v58 = vld [vmem:[#allocation6 + $0x48] sm:$0xff]
    %v59 = vld [vmem:[#allocation6 + $0x50] sm:$0xff]
    %v60 = vld [vmem:[#allocation6 + $0x58] sm:$0xff]
    %v61 = vld [vmem:[#allocation6 + $0x60] sm:$0xff]
    %v62 = vld [vmem:[#allocation6 + $0x68] sm:$0xff]
    %v63 = vld [vmem:[#allocation6 + $0x70] sm:$0xff]
    %v64 = vld [vmem:[#allocation6 + $0x78] sm:$0xff]
    %v65 = vld [vmem:[#allocation6 + $0x80] sm:$0xff]
    %v66 = vld [vmem:[#allocation6 + $0x88] sm:$0xff]
    %v67 = vld [vmem:[#allocation6 + $0x90] sm:$0xff]
    %v68 = vld [vmem:[#allocation6 + $0x98] sm:$0xff]
    %v69 = vld [vmem:[#allocation6 + $0xa0] sm:$0xff]
    %v70 = vld [vmem:[#allocation6 + $0xa8] sm:$0xff]
    %v71 = vld [vmem:[#allocation6 + $0xb0] sm:$0xff]
    %v72 = vld [vmem:[#allocation6 + $0xb8] sm:$0xff]
    %v73 = vld [vmem:[#allocation6 + $0xc0] sm:$0xff]
    %v74 = vld [vmem:[#allocation6 + $0xc8] sm:$0xff]
    %v75 = vld [vmem:[#allocation6 + $0xd0] sm:$0xff]
    %v76 = vld [vmem:[#allocation6 + $0xd8] sm:$0xff]
    %v77 = vld [vmem:[#allocation6 + $0xe0] sm:$0xff]
    %v78 = vld [vmem:[#allocation6 + $0xe8] sm:$0xff]
    %v79 = vld [vmem:[#allocation6 + $0xf0] sm:$0xff]
    %v80 = vld [vmem:[#allocation6 + $0xf8] sm:$0xff]
    %81 = vmatprep.subr.mxu0 0.0
    %82 = vmatpush1.msra.mxu0 %v49
    %83 = vmatprep.subr.mxu0 0.0
    %84 = vmatpush1.msra.mxu0 %v50
    %85 = vmatprep.subr.mxu0 0.0
    %86 = vmatpush1.msra.mxu0 %v51
    %87 = vmatprep.subr.mxu0 0.0
    %88 = vmatpush1.msra.mxu0 %v52
    %89 = vmatprep.subr.mxu0 0.0
    %90 = vmatpush1.msra.mxu0 %v53
    %91 = vmatprep.subr.mxu0 0.0
    %92 = vmatpush1.msra.mxu0 %v54
    %93 = vmatprep.subr.mxu0 0.0
    %94 = vmatpush1.msra.mxu0 %v55
    %95 = vmatprep.subr.mxu0 0.0
    %96 = vmatpush1.msra.mxu0 %v56
    %97 = vmatprep.subr.mxu0 0.0
    %98 = vmatpush1.msra.mxu0 %v57
    %99 = vmatprep.subr.mxu0 0.0
    %100 = vmatpush1.msra.mxu0 %v58
    %101 = vmatprep.subr.mxu0 0.0
    %102 = vmatpush1.msra.mxu0 %v59
    %103 = vmatprep.subr.mxu0 0.0
    %104 = vmatpush1.msra.mxu0 %v60
    %105 = vmatprep.subr.mxu0 0.0
    %106 = vmatpush1.msra.mxu0 %v61
    %107 = vmatprep.subr.mxu0 0.0
    %108 = vmatpush1.msra.mxu0 %v62
    %109 = vmatprep.subr.mxu0 0.0
    %110 = vmatpush1.msra.mxu0 %v63
    %111 = vmatprep.subr.mxu0 0.0
    %112 = vmatpush1.msra.mxu0 %v64
    %113 = vmatprep.subr.mxu0 0.0
    %114 = vmatpush1.msra.mxu0 %v65
    %115 = vmatprep.subr.mxu0 0.0
    %116 = vmatpush1.msra.mxu0 %v66
    %117 = vmatprep.subr.mxu0 0.0
    %118 = vmatpush1.msra.mxu0 %v67
    %119 = vmatprep.subr.mxu0 0.0
    %120 = vmatpush1.msra.mxu0 %v68
    %121 = vmatprep.subr.mxu0 0.0
    %122 = vmatpush1.msra.mxu0 %v69
    %123 = vmatprep.subr.mxu0 0.0
    %124 = vmatpush1.msra.mxu0 %v70
    %125 = vmatprep.subr.mxu0 0.0
    %126 = vmatpush1.msra.mxu0 %v71
    %127 = vmatprep.subr.mxu0 0.0
    %128 = vmatpush1.msra.mxu0 %v72
    %129 = vmatprep.subr.mxu0 0.0
    %130 = vmatpush1.msra.mxu0 %v73
    %131 = vmatprep.subr.mxu0 0.0
    %132 = vmatpush1.msra.mxu0 %v74
    %133 = vmatprep.subr.mxu0 0.0
    %134 = vmatpush1.msra.mxu0 %v75
    %135 = vmatprep.subr.mxu0 0.0
    %136 = vmatpush1.msra.mxu0 %v76
    %137 = vmatprep.subr.mxu0 0.0
    %138 = vmatpush1.msra.mxu0 %v77
    %139 = vmatprep.subr.mxu0 0.0
    %140 = vmatpush1.msra.mxu0 %v78
    %141 = vmatprep.subr.mxu0 0.0
    %142 = vmatpush1.msra.mxu0 %v79
    %143 = vmatprep.subr.mxu0 0.0
    %144 = vmatpush1.msra.mxu0 %v80
    %145 = vmatprep.mubr.f32.mxu0 %v48
    %146 = vmatmul.mubr.f32.gmra.mrb[0].mxu0 %v47
    %v147 = vpop.f32.mrb[0].mxu0
    %v148 = vadd.f32 0.0, %v147
    %v149 = vpop.f32.mrb[0].mxu0
    %150 = vdwg.mxu0
    %v151 = vadd.f32 %v46, %v148
    %152 = vst [vmem:[#allocation2] sm:$0xff] %v151
    // Predicated region
    $region26: #{tpu_custom_call.1} parent=1 // pred_check
      %p153 = pneg %p41
    $region27: #{tpu_custom_call.1} parent=1 // pred_check_branch
      %155 = sbr.rel (%p153) target = $region29
    $region28: #{tpu_custom_call.1} parent=1 // pred_region
      %v156 = vld [vmem:[#allocation2] sm:$0xff]
      %v157 = vld [vmem:[%s2] sm:$0x1]
      %v159 = vlaneseq
      %v160 = vshrl.u32 %v159, 7
      %v161 = vsub.s32 0, %v160
      %v162 = vrot.slane %v157, %v161
      %v164 = vadd.f32 %v156, %v162
      %165 = vst [vmem:[#allocation8] sm:$0xff] %v164
    $region29: #{tpu_custom_call.1} parent=1 // pred_fallthru
      _
    // Predicated region
    $region30: #{tpu_custom_call.1} parent=1 // pred_check
      _
    $region31: #{tpu_custom_call.1} parent=1 // pred_check_branch
      %167 = sbr.rel (0) target = $region33
    $region32: #{tpu_custom_call.1} parent=1 // pred_region
      %s169 = ssub.s32 128, 128
      %170 = vsyncadd [#allocation5], %s169
      %s172 = sshll.u32 [#allocation8], 4
      %s173 = int_to_ptr.vmem [resolvable:$true] %s172
      %175 = dma.vmem_to_hbm [thread:$0]  %s173, 128, %s3, [#allocation5]
    $region33: #{tpu_custom_call.1} parent=1 // pred_fallthru
      _
    // Predicated region
    $region34: #{tpu_custom_call.1} parent=1 // pred_check
      _
    $region35: #{tpu_custom_call.1} parent=1 // pred_check_branch
      %177 = sbr.rel (0) target = $region37
    $region36: #{tpu_custom_call.1} parent=1 // pred_region
      %178 = dma.done [#allocation5], 128
    $region37: #{tpu_custom_call.1} parent=1 // pred_fallthru
      _
    %179 = vsyncpa [#allocation4], 1
    %180 = vsyncpa [#allocation7], 1
    %181 = vsyncpa [#allocation5], 1

</llo_original>
